<compile_context>
chip_gen: v7x
topology: tpu7x:2x2x1
jax: 0.10.0
libtpu: 0.0.40
codegen_flags: <defaults>
</compile_context>

<pallas_src>
import jax
import jax.numpy as jnp
import numpy as np
from jax.experimental import pallas as pl
from jax.experimental.pallas import tpu as pltpu


# Sublane tile height by element size (32-bit packing rule).
_DTYPE_SUBLANE = {4: 8, 2: 16, 1: 32}

# Block-size tuning constants (chip-agnostic: safe on v5e/v6e/v7x).
_TARGET_INPUT_BLOCK_BYTES = 2 * 1024 * 1024    # ~85% HBM roofline at 1-4 MiB
_MAX_BLOCK_VMEM_BYTES = 24 * 1024 * 1024       # double-buffered I/O + f32 temps
_MIN_VMEM_LIMIT = 16 * 1024 * 1024
_MAX_VMEM_LIMIT = 32 * 1024 * 1024             # <= default scoped limit on v7x


def _choose_block_rows(n_rows: int, hidden: int, itemsize: int) -> int:
    """Pick a row-block size: HBM-BW friendly, VMEM-safe, megacore-friendly."""
    sublane = _DTYPE_SUBLANE.get(itemsize, 8)
    padded_rows = -(-n_rows // sublane) * sublane

    # ~2 MiB of input per block.
    target = _TARGET_INPUT_BLOCK_BYTES // (hidden * itemsize)

    # Per-row VMEM: 2x double-buffered input + 2x output (+ ~3 f32 temporaries:
    # x_f32 / centered / out_f32 before the store cast).
    per_row = 4 * hidden * itemsize + 3 * hidden * 4
    max_by_vmem = _MAX_BLOCK_VMEM_BYTES // per_row

    block = max(sublane, min(target, max_by_vmem, padded_rows))

    # Keep the 1-D grid at >= 2 (ideally 4) steps when the row count allows it:
    # v7x has 2 TensorCores, and a length-1 grid also kills DMA/compute overlap.
    desired_steps = min(4, padded_rows // sublane)
    if desired_steps > 1:
        per_step = -(-padded_rows // desired_steps)
        block = min(block, per_step)

    # Round down to a sublane multiple -> unmasked stores, no layout padding.
    block = max(sublane, (block // sublane) * sublane)
    return block


def _make_kernel(eps: float, mode: str, has_weight: bool, has_bias: bool):
    """Builds a Pallas kernel body for one row-block of the input."""

    def kernel(*refs):
        idx = 0
        x_ref = refs[idx]; idx += 1
        w_ref = None
        b_ref = None
        if has_weight:
            w_ref = refs[idx]; idx += 1
        if has_bias:
            b_ref = refs[idx]; idx += 1
        o_ref = refs[idx]

        # Reductions in float32 (matches torch.autocast(enabled=False) +
        # .to(torch.float32) in the PyTorch module).
        x = x_ref[...].astype(jnp.float32)
        inv_d = jnp.float32(1.0 / x.shape[-1])
        eps_f = jnp.float32(eps)

        if mode == "default":
            # F.layer_norm semantics. Numerically-stable two-pass form:
            # mean = E[x]; var = E[(x-mean)^2]. Both passes stay on the
            # VMEM-resident block (hidden under the DMA time).
            mean = jnp.sum(x, axis=-1, keepdims=True) * inv_d
            xc = x - mean
            var = jnp.sum(xc * xc, axis=-1, keepdims=True) * inv_d
            out = xc * jax.lax.rsqrt(var + eps_f)
            if has_weight:
                out = out * w_ref[...].astype(jnp.float32)
            if has_bias:
                out = out + b_ref[...].astype(jnp.float32)
            o_ref[...] = out.astype(o_ref.dtype)     # single full-block store
        else:
            # RMS variants: variance = mean(x^2); normalize; cast back to the
            # original dtype BEFORE the affine transform (as in PyTorch).
            var = jnp.sum(x * x, axis=-1, keepdims=True) * inv_d
            xn = (x * jax.lax.rsqrt(var + eps_f)).astype(o_ref.dtype)
            if has_weight:
                w = w_ref[...]
                if mode == "gemma_rms":
                    # (1 + weight) in the weight's dtype, exactly as the module.
                    out = xn * (1 + w)
                else:  # "rms"
                    out = w * xn
                if has_bias:
                    out = out + b_ref[...]
                o_ref[...] = out.astype(o_ref.dtype)
            else:
                # Module ignores bias when weight is None.
                o_ref[...] = xn

    return kernel


def layer_norm_pallas(x, weight=None, bias=None, *, eps=1e-5, mode="default",
                      block_rows=None):
    """Layer norm along the last axis of `x` with a Pallas TPU kernel.

    mode: "default" (LayerNorm), "rms" (RMSLayerNorm), "gemma_rms" (GemmaRMSLayerNorm)
    """
    assert mode in ("default", "rms", "gemma_rms")
    orig_shape = x.shape
    D = orig_shape[-1]
    assert D % 128 == 0, "hidden dim must be a multiple of 128 for TPU lanes"
    x2 = x.reshape(-1, D)
    R = x2.shape[0]
    itemsize = jnp.dtype(x.dtype).itemsize
    sublane = _DTYPE_SUBLANE.get(itemsize, 8)

    if block_rows is None:
        block_rows = _choose_block_rows(R, D, itemsize)
    else:
        block_rows = max(sublane, (block_rows // sublane) * sublane)

    has_weight = weight is not None
    has_bias = bias is not None

    inputs = [x2]
    in_specs = [pl.BlockSpec((block_rows, D), lambda i: (i, 0))]
    if has_weight:
        inputs.append(weight.reshape(1, D))
        in_specs.append(pl.BlockSpec((1, D), lambda i: (0, 0)))
    if has_bias:
        inputs.append(bias.reshape(1, D))
        in_specs.append(pl.BlockSpec((1, D), lambda i: (0, 0)))

    kernel = _make_kernel(eps, mode, has_weight, has_bias)

    # Ragged row counts: rely on Pallas boundary handling for the partial last
    # block (padded reads; out-of-bounds writes masked).  Garbage rows in the
    # padded region only affect their own (masked) outputs since the reduction
    # is per-row along the lane axis.  No jnp.pad / output slice -> no extra
    # HBM traffic.
    grid = pl.cdiv(R, block_rows)

    # Scoped VMEM limit: double-buffered I/O + ~3 f32 temporaries + params,
    # with 1.5x headroom, clamped to a range that is safe on every chip
    # (<= 32 MiB, i.e. below v7x's 64 MiB physical VMEM).
    block_bytes = block_rows * D * itemsize
    est_vmem = 4 * block_bytes + 3 * block_rows * D * 4 + 4 * D * 8
    vmem_limit = int(min(max(est_vmem * 3 // 2, _MIN_VMEM_LIMIT), _MAX_VMEM_LIMIT))

    out = pl.pallas_call(
        kernel,
        out_shape=jax.ShapeDtypeStruct((R, D), x.dtype),
        grid_spec=pl.GridSpec(
            grid=(grid,),
            in_specs=in_specs,
            out_specs=pl.BlockSpec((block_rows, D), lambda i: (i, 0)),
        ),
        compiler_params=pltpu.CompilerParams(
            dimension_semantics=("parallel",),
            vmem_limit_bytes=vmem_limit,
        ),
    )(*inputs)

    return out.reshape(orig_shape)


# ---------------------------- reference (plain JAX) ----------------------------

def _ref_layer_norm(x, weight, bias, eps, mode):
    xf = x.astype(jnp.float32)
    if mode == "default":
        mean = jnp.mean(xf, axis=-1, keepdims=True)
        var = jnp.mean((xf - mean) ** 2, axis=-1, keepdims=True)
        out = (xf - mean) * jax.lax.rsqrt(var + eps)
        if weight is not None:
            out = out * weight.astype(jnp.float32)
        if bias is not None:
            out = out + bias.astype(jnp.float32)
        return out.astype(x.dtype)
    else:
        var = jnp.mean(xf * xf, axis=-1, keepdims=True)
        xn = (xf * jax.lax.rsqrt(var + eps)).astype(x.dtype)
        if weight is not None:
            if mode == "gemma_rms":
                out = xn * (1 + weight)
            else:
                out = weight * xn
            if bias is not None:
                out = out + bias
            return out.astype(x.dtype)
        return xn


if __name__ == "__main__":
    eps = 1e-5
    key = jax.random.PRNGKey(0)
    failures = []

    def check(name, x, w, b, mode, atol, rtol):
        out = jax.block_until_ready(layer_norm_pallas(x, w, b, eps=eps, mode=mode))
        ref = _ref_layer_norm(x, w, b, eps, mode)
        if not np.allclose(np.asarray(out, dtype=np.float32),
                           np.asarray(ref, dtype=np.float32),
                           atol=atol, rtol=rtol):
            failures.append(name)

    # Small, module-consistent shapes: batch=2, seq=8, d_model=128.
    batch, seq, d_model = 2, 8, 128
    k1, k2, k3, k4 = jax.random.split(key, 4)
    x_f32 = jax.random.normal(k1, (batch, seq, d_model), dtype=jnp.float32)
    weight = 1.0 + 0.1 * jax.random.normal(k3, (d_model,), dtype=jnp.float32)
    bias = 0.1 * jax.random.normal(k4, (d_model,), dtype=jnp.float32)

    for mode, w, b in [
        ("default", weight, bias),     # LayerNorm (elementwise_affine + bias)
        ("rms", weight, None),         # RMSLayerNorm
        ("gemma_rms", weight, None),   # GemmaRMSLayerNorm
        ("default", None, None),       # elementwise_affine=False path
    ]:
        check(f"{mode}-f32", x_f32, w, b, mode, atol=2e-5, rtol=1e-5)

    # Odd row count -> exercises the ragged-tail (masked partial block) path.
    x_odd = jax.random.normal(k2, (3, 5, d_model), dtype=jnp.float32)
    check("default-odd", x_odd, weight, bias, "default", atol=2e-5, rtol=1e-5)
    check("rms-odd", x_odd, weight, None, "rms", atol=2e-5, rtol=1e-5)
    check("gemma-odd", x_odd, weight, None, "gemma_rms", atol=2e-5, rtol=1e-5)

    # bf16 input -> exercises the 16-row sublane tile + f32-reduction path.
    x_bf16 = x_f32.astype(jnp.bfloat16)
    w_bf16 = weight.astype(jnp.bfloat16)
    b_bf16 = bias.astype(jnp.bfloat16)
    check("rms-bf16", x_bf16, w_bf16, None, "rms", atol=2e-2, rtol=2e-2)
    check("gemma-bf16", x_bf16, w_bf16, None, "gemma_rms", atol=2e-2, rtol=2e-2)
    check("default-bf16", x_bf16, w_bf16, b_bf16, "default", atol=2e-2, rtol=2e-2)

    if not failures:
        print("KERNEL_OK")
    else:
        print("MISMATCH:", failures)
</pallas_src>

<mosaic_0001>
module attributes {stable_mosaic.version = 11 : i64} {
  func.func @kernel(%arg0: i32, %arg1: memref<8x128xf32, #tpu.memory_space<vmem>>, %arg2: memref<1x128xf32, #tpu.memory_space<vmem>>, %arg3: memref<1x128xf32, #tpu.memory_space<vmem>>, %arg4: memref<8x128xf32, #tpu.memory_space<vmem>>) attributes {dimension_semantics = [#tpu.dimension_semantics<parallel>], iteration_bounds = array<i64: 2>, scalar_prefetch = 0 : i64, scratch_operands = 0 : i64, tpu.core_type = #tpu.core_type<tc>, window_params = [{transform_indices = @transform_0, window_bounds = array<i64: 8, 128>}, {pipeline_mode = #tpu.pipeline_mode<synchronous>, transform_indices = @transform_1, window_bounds = array<i64: 1, 128>}, {pipeline_mode = #tpu.pipeline_mode<synchronous>, transform_indices = @transform_2, window_bounds = array<i64: 1, 128>}, {transform_indices = @transform_3, window_bounds = array<i64: 8, 128>}]} {
    %c0 = arith.constant 0 : index
    %c0_0 = arith.constant 0 : index
    %0 = vector.load %arg1[%c0, %c0_0] : memref<8x128xf32, #tpu.memory_space<vmem>>, vector<8x128xf32>
    %cst = arith.constant dense<0.000000e+00> : vector<8xf32>
    %1 = vector.multi_reduction <add>, %0, %cst [1] : vector<8x128xf32> to vector<8xf32>
    %2 = vector.shape_cast %1 : vector<8xf32> to vector<8x1xf32>
    %cst_1 = arith.constant 7.812500e-03 : f32
    %3 = vector.broadcast %cst_1 : f32 to vector<8x1xf32>
    %4 = arith.mulf %2, %3 : vector<8x1xf32>
    %5 = vector.broadcast %4 : vector<8x1xf32> to vector<8x128xf32>
    %6 = arith.subf %0, %5 : vector<8x128xf32>
    %7 = arith.mulf %6, %6 : vector<8x128xf32>
    %cst_2 = arith.constant dense<0.000000e+00> : vector<8xf32>
    %8 = vector.multi_reduction <add>, %7, %cst_2 [1] : vector<8x128xf32> to vector<8xf32>
    %9 = vector.shape_cast %8 : vector<8xf32> to vector<8x1xf32>
    %cst_3 = arith.constant 7.812500e-03 : f32
    %10 = vector.broadcast %cst_3 : f32 to vector<8x1xf32>
    %11 = arith.mulf %9, %10 : vector<8x1xf32>
    %cst_4 = arith.constant 9.99999974E-6 : f32
    %12 = vector.broadcast %cst_4 : f32 to vector<8x1xf32>
    %13 = arith.addf %11, %12 : vector<8x1xf32>
    %14 = math.rsqrt %13 : vector<8x1xf32>
    %15 = vector.broadcast %14 : vector<8x1xf32> to vector<8x128xf32>
    %16 = arith.mulf %6, %15 : vector<8x128xf32>
    %c0_5 = arith.constant 0 : index
    %c0_6 = arith.constant 0 : index
    %17 = vector.load %arg2[%c0_5, %c0_6] : memref<1x128xf32, #tpu.memory_space<vmem>>, vector<1x128xf32>
    %18 = vector.broadcast %17 : vector<1x128xf32> to vector<8x128xf32>
    %19 = arith.mulf %16, %18 : vector<8x128xf32>
    %c0_7 = arith.constant 0 : index
    %c0_8 = arith.constant 0 : index
    %20 = vector.load %arg3[%c0_7, %c0_8] : memref<1x128xf32, #tpu.memory_space<vmem>>, vector<1x128xf32>
    %21 = vector.broadcast %20 : vector<1x128xf32> to vector<8x128xf32>
    %22 = arith.addf %19, %21 : vector<8x128xf32>
    %c0_9 = arith.constant 0 : index
    %c0_10 = arith.constant 0 : index
    %23 = vector.load %arg4[%c0_9, %c0_10] : memref<8x128xf32, #tpu.memory_space<vmem>>, vector<8x128xf32>
    tpu.vector_store %arg4[%c0_9, %c0_10], %22 {strides = array<i32>} : memref<8x128xf32, #tpu.memory_space<vmem>>, vector<8x128xf32>,
    return
  }
  func.func @transform_0(%arg0: i32) -> (i32, i32) {
    %c0_i32 = arith.constant 0 : i32
    %c0_i32_0 = arith.constant 0 : i32
    return %arg0, %c0_i32 : i32, i32
  }
  func.func @transform_1(%arg0: i32) -> (i32, i32) {
    %c0_i32 = arith.constant 0 : i32
    %c0_i32_0 = arith.constant 0 : i32
    %c0_i32_1 = arith.constant 0 : i32
    return %c0_i32, %c0_i32_0 : i32, i32
  }
  func.func @transform_2(%arg0: i32) -> (i32, i32) {
    %c0_i32 = arith.constant 0 : i32
    %c0_i32_0 = arith.constant 0 : i32
    %c0_i32_1 = arith.constant 0 : i32
    return %c0_i32, %c0_i32_0 : i32, i32
  }
  func.func @transform_3(%arg0: i32) -> (i32, i32) {
    %c0_i32 = arith.constant 0 : i32
    %c0_i32_0 = arith.constant 0 : i32
    return %arg0, %c0_i32 : i32, i32
  }
}

</mosaic_0001>

<llo_original>
// kernel: tpu_custom_call.1
$region0: #{tpu_custom_call.1}
  #allocation0 [shape = 'u32[]', space=smem, size = 0x4, offset = 0x4, fixed_abs, tag = 'smem constant byte address 0x4 - core index']
  #allocation1 [shape = 'u32[144,128]{1,0:T(1,128)}', space=vmem, size = 0x12000, scoped, tag = 'internal scratch']
  %s0 = inlined_call_operand.hbm [shape: f32[16,128], index: 0, kind: input, shape index: {}]
  %s1 = inlined_call_operand.vmem [shape: f32[1,128], index: 1, kind: input, shape index: {}]
  %s2 = inlined_call_operand.vmem [shape: f32[1,128], index: 2, kind: input, shape index: {}]
  %s3 = inlined_call_operand.hbm [shape: f32[16,128], index: 3, kind: output, shape index: {}]
  %s4 = sld [smem:[#allocation0]]
  $region49: #{tpu_custom_call.1} parent=0
    _
  %s6 = ssub.s32 1, %s4
  %s7 = scalar_select 0, %s6, %s4
  $region1: #{tpu_custom_call.1} parent=0
    #allocation2 [shape = 'u8[8192]{0}', space=vmem, size = 0x2000, scoped, tag = 'input window, operand 0']
    #allocation3 [shape = 's32[2]{0}', space=sflag, size = 0x8, scoped, tag = 'scoped memory for tpu_custom_call.1']
    #allocation4 [shape = 's32[2]{0}', space=sflag, size = 0x8, scoped, tag = 'scoped memory for tpu_custom_call.1']
    #allocation5 [shape = 'u8[8192]{0}', space=vmem, size = 0x2000, scoped, tag = 'output window, operand 0']
    %8 = vsyncpa [#allocation3], 0
    %s9 = scalar_lea.sflag [#allocation3], 1
    %10 = vsyncpa %s9, 0
    %11 = vsyncpa [#allocation4], 0
    %s12 = scalar_lea.sflag [#allocation4], 1
    %13 = vsyncpa %s12, 0
    loop: start=0, step=1, limit=4
    $region2: #{tpu_custom_call.1} parent=1 // loop_pre_header
      _
    $region3: #{tpu_custom_call.1} parent=1 // loop_header
      %s15 = sphi 0, %s19
      %p16 = scmp.ge.s32.totalorder %s15, 4
      %s25 = sphi 0, %s27
      %s28 = sphi 0, %s25
      %s29 = sphi 0, %s28
      %s45 = sphi 0, %s29
      %s49 = sphi 0, %s49
      %s51 = sphi 0, %s49
      %s52 = sphi 0, %s51
      %s66 = sphi 0, %s52
      %s70 = sphi 0, %s70
      %s72 = sphi 0, %s70
      %s73 = sphi 0, %s72
      %s87 = sphi 0, %s73
      %s93 = sphi 0, %s95
      %s96 = sphi 0, %s93
      %s97 = sphi 0, %s96
      %s113 = sphi 0, %s97
    $region4: #{tpu_custom_call.1} parent=1 // loop_header_branch
      %18 = sbr.rel (%p16) target = $region8
    $region5: #{tpu_custom_call.1} parent=1 // loop_body
      %s20 = ssub.s32 %s15, 1
      %s21 = ssub.s32 %s15, 2
      %s22 = sadd.s32 %s15, 1
      %s23 = ssub.s32 %s15, %s22
      %p24 = scmp.eq.s32.totalorder %s23, 0
      %s26 = sadd.s32 %s25, 1
      %s27 = scalar_select %p24, %s25, %s26
      %p30 = pneg %p24
      %p31 = scmp.eq.s32.totalorder %s15, 1
      %p32 = por %p30, %p31
      %p33 = scmp.ne.s32.totalorder %s25, %s28
      %p34 = scmp.eq.s32.totalorder %s15, 0
      %p35 = por %p33, %p34
      %p36 = scmp.ne.s32.totalorder %s25, %s28
      %p37 = scmp.eq.s32.totalorder %s20, 1
      %p38 = por %p36, %p37
      %p39 = scmp.ne.s32.totalorder %s28, %s29
      %p40 = scmp.eq.s32.totalorder %s20, 0
      %p41 = por %p39, %p40
      %p42 = scmp.ne.s32.totalorder %s28, %s29
      %p43 = scmp.eq.s32.totalorder %s21, 1
      %p44 = por %p42, %p43
      %p46 = scmp.ne.s32.totalorder %s29, %s45
      %p47 = scmp.eq.s32.totalorder %s21, 0
      %p48 = por %p46, %p47
      %s50 = sadd.s32 %s49, 1
      %p53 = scmp.eq.s32.totalorder %s15, 1
      %p54 = scmp.ne.s32.totalorder %s49, %s51
      %p55 = scmp.eq.s32.totalorder %s15, 0
      %p56 = por %p54, %p55
      %p57 = scmp.ne.s32.totalorder %s49, %s51
      %p58 = scmp.eq.s32.totalorder %s20, 1
      %p59 = por %p57, %p58
      %p60 = scmp.ne.s32.totalorder %s51, %s52
      %p61 = scmp.eq.s32.totalorder %s20, 0
      %p62 = por %p60, %p61
      %p63 = scmp.ne.s32.totalorder %s51, %s52
      %p64 = scmp.eq.s32.totalorder %s21, 1
      %p65 = por %p63, %p64
      %p67 = scmp.ne.s32.totalorder %s52, %s66
      %p68 = scmp.eq.s32.totalorder %s21, 0
      %p69 = por %p67, %p68
      %s71 = sadd.s32 %s70, 1
      %p74 = scmp.eq.s32.totalorder %s15, 1
      %p75 = scmp.ne.s32.totalorder %s70, %s72
      %p76 = scmp.eq.s32.totalorder %s15, 0
      %p77 = por %p75, %p76
      %p78 = scmp.ne.s32.totalorder %s70, %s72
      %p79 = scmp.eq.s32.totalorder %s20, 1
      %p80 = por %p78, %p79
      %p81 = scmp.ne.s32.totalorder %s72, %s73
      %p82 = scmp.eq.s32.totalorder %s20, 0
      %p83 = por %p81, %p82
      %p84 = scmp.ne.s32.totalorder %s72, %s73
      %p85 = scmp.eq.s32.totalorder %s21, 1
      %p86 = por %p84, %p85
      %p88 = scmp.ne.s32.totalorder %s73, %s87
      %p89 = scmp.eq.s32.totalorder %s21, 0
      %p90 = por %p88, %p89
      %s91 = ssub.s32 %s15, %s22
      %p92 = scmp.eq.s32.totalorder %s91, 0
      %s94 = sadd.s32 %s93, 1
      %s95 = scalar_select %p92, %s93, %s94
      %p98 = pneg %p92
      %p99 = scmp.eq.s32.totalorder %s15, 1
      %p100 = por %p98, %p99
      %p101 = scmp.ne.s32.totalorder %s93, %s96
      %p102 = scmp.eq.s32.totalorder %s15, 0
      %p103 = por %p101, %p102
      %p104 = scmp.ne.s32.totalorder %s93, %s96
      %p105 = scmp.eq.s32.totalorder %s20, 1
      %p106 = por %p104, %p105
      %p107 = scmp.ne.s32.totalorder %s96, %s97
      %p108 = scmp.eq.s32.totalorder %s20, 0
      %p109 = por %p107, %p108
      %p110 = scmp.ne.s32.totalorder %s96, %s97
      %p111 = scmp.eq.s32.totalorder %s21, 1
      %p112 = por %p110, %p111
      %p114 = scmp.ne.s32.totalorder %s97, %s113
      %p115 = scmp.eq.s32.totalorder %s21, 0
      %p116 = por %p114, %p115
      %p117 = scmp.le.s32.totalorder 1, %s15
      %p118 = scmp.lt.s32.totalorder %s15, 3
      %p119 = pnand %p117, %p118
      %p120 = pneg %p119
      // Predicated region
      $region9: #{tpu_custom_call.1} parent=5 // pred_check
        _
      $region10: #{tpu_custom_call.1} parent=5 // pred_check_branch
        %122 = sbr.rel (%p119) target = $region12
      $region11: #{tpu_custom_call.1} parent=5 // pred_region
        %s123 = ssub.s32 %s15, 1
        // Predicated region
        $region13: #{tpu_custom_call.1} parent=11 // pred_check
          %p124 = pneg %p62
        $region14: #{tpu_custom_call.1} parent=11 // pred_check_branch
          %126 = sbr.rel (%p124) target = $region16
        $region15: #{tpu_custom_call.1} parent=11 // pred_region
          _
        $region16: #{tpu_custom_call.1} parent=11 // pred_fallthru
          _
        // Predicated region
        $region17: #{tpu_custom_call.1} parent=11 // pred_check
          %p127 = pneg %p83
        $region18: #{tpu_custom_call.1} parent=11 // pred_check_branch
          %129 = sbr.rel (%p127) target = $region20
        $region19: #{tpu_custom_call.1} parent=11 // pred_region
          _
        $region20: #{tpu_custom_call.1} parent=11 // pred_fallthru
          _
      $region12: #{tpu_custom_call.1} parent=5 // pred_fallthru
        _
      %p130 = scmp.lt.s32.totalorder %s15, 2
      // Predicated region
      $region21: #{tpu_custom_call.1} parent=5 // pred_check
        %p131 = pneg %p130
      $region22: #{tpu_custom_call.1} parent=5 // pred_check_branch
        %133 = sbr.rel (%p131) target = $region24
      $region23: #{tpu_custom_call.1} parent=5 // pred_region
        // Predicated region
        $region25: #{tpu_custom_call.1} parent=23 // pred_check
          %p134 = pneg %p35
        $region26: #{tpu_custom_call.1} parent=23 // pred_check_branch
          %136 = sbr.rel (%p134) target = $region28
        $region27: #{tpu_custom_call.1} parent=23 // pred_region
          %s137 = sand.u32 %s25, 1
          %s138 = scalar_lea.sflag [#allocation3], %s137
          %s139 = sand.u32 %s25, 1
          %s140 = smul.addr %s139, 8
          %s141 = scalar_lea.vmem [#allocation2], %s140
          %s143 = ssub.s32 128, 128
          %144 = vsyncadd %s138, %s143
          %s145 = smul.addr %s15, 128
          %s146 = scalar_lea.hbm %s0, %s145
          %s148 = sshll.u32 %s141, 4
          %s149 = int_to_ptr.vmem [resolvable:$true] %s148
          %151 = dma.hbm_to_vmem [thread:$0]  %s146, 128, %s149, %s138
        $region28: #{tpu_custom_call.1} parent=23 // pred_fallthru
          _
      $region24: #{tpu_custom_call.1} parent=5 // pred_fallthru
        _
      %p152 = scmp.le.s32.totalorder 1, %s15
      %p153 = scmp.lt.s32.totalorder %s15, 3
      %p154 = pnand %p152, %p153
      %p155 = pneg %p154
      // Predicated region
      $region29: #{tpu_custom_call.1} parent=5 // pred_check
        _
      $region30: #{tpu_custom_call.1} parent=5 // pred_check_branch
        %157 = sbr.rel (%p154) target = $region32
      $region31: #{tpu_custom_call.1} parent=5 // pred_region
        %s158 = ssub.s32 %s15, 1
        %s159 = sand.u32 %s28, 1
        %s160 = scalar_lea.sflag [#allocation3], %s159
        %s161 = sand.u32 %s28, 1
        %s162 = smul.addr %s161, 8
        %s163 = scalar_lea.vmem [#allocation2], %s162
        // Predicated region
        $region33: #{tpu_custom_call.1} parent=31 // pred_check
          %p164 = pneg %p41
        $region34: #{tpu_custom_call.1} parent=31 // pred_check_branch
          %166 = sbr.rel (%p164) target = $region36
        $region35: #{tpu_custom_call.1} parent=31 // pred_region
          %167 = dma.done %s160, 128
        $region36: #{tpu_custom_call.1} parent=31 // pred_fallthru
          _
        %s168 = sand.u32 %s28, 1
        %s169 = scalar_lea.sflag [#allocation3], %s168
        %s170 = sand.u32 %s28, 1
        %s171 = smul.addr %s170, 8
        %s172 = scalar_lea.vmem [#allocation2], %s171
        %p173 = pneg %p41
        %p174 = pneg %p38
        %p175 = pneg %p62
        %p176 = pneg %p59
        %p177 = pneg %p83
        %p178 = pneg %p80
        %p179 = pneg %p109
        %p180 = pneg %p106
        %s181 = sand.u32 %s96, 1
        %s182 = scalar_lea.sflag [#allocation4], %s181
        %s183 = sand.u32 %s96, 1
        %s184 = smul.addr %s183, 8
        %s185 = scalar_lea.vmem [#allocation5], %s184
        %v186 = vld [vmem:[%s163] sm:$0xff]
        %187 = vadd.xlane.f32.xlu0 %v186
        %v188 = vpop.xlane.xlu0 %187
        %v189 = vmul.f32 %v188, 0.0078125
        %v190 = vsub.f32 %v186, %v189
        %v191 = vmul.f32 %v190, %v190
        %192 = vadd.xlane.f32.xlu0 %v191
        %v193 = vpop.xlane.xlu0 %192
        %v194 = vmul.f32 %v193, 0.0078125
        %v195 = vadd.f32 %v194, 1e-05
        %v196 = vrsqrt.pop %v195
        %v197 = vmul.f32 %v190, %v196
        %v198 = vld [vmem:[%s1] sm:$0x1]
        %v200 = vlaneseq
        %v201 = vshrl.u32 %v200, 7
        %v202 = vsub.s32 0, %v201
        %v203 = vrot.slane %v198, %v202
        %v205 = vmul.f32 %v197, %v203
        %v206 = vld [vmem:[%s2] sm:$0x1]
        %v208 = vlaneseq
        %v209 = vshrl.u32 %v208, 7
        %v210 = vsub.s32 0, %v209
        %v211 = vrot.slane %v206, %v210
        %v213 = vadd.f32 %v205, %v211
        %214 = vst [vmem:[%s185] sm:$0xff] %v213
        %s215 = sand.u32 %s96, 1
        %s216 = scalar_lea.sflag [#allocation4], %s215
        %s217 = sand.u32 %s96, 1
        %s218 = smul.addr %s217, 8
        %s219 = scalar_lea.vmem [#allocation5], %s218
        // Predicated region
        $region37: #{tpu_custom_call.1} parent=31 // pred_check
          %p220 = pneg %p106
        $region38: #{tpu_custom_call.1} parent=31 // pred_check_branch
          %222 = sbr.rel (%p220) target = $region40
        $region39: #{tpu_custom_call.1} parent=31 // pred_region
          %s224 = ssub.s32 128, 128
          %225 = vsyncadd %s216, %s224
          %s226 = smul.addr %s20, 128
          %s227 = scalar_lea.hbm %s3, %s226
          %s229 = sshll.u32 %s219, 4
          %s230 = int_to_ptr.vmem [resolvable:$true] %s229
          %232 = dma.vmem_to_hbm [thread:$0]  %s230, 128, %s227, %s216
        $region40: #{tpu_custom_call.1} parent=31 // pred_fallthru
          _
      $region32: #{tpu_custom_call.1} parent=5 // pred_fallthru
        _
      %p233 = scmp.le.s32.totalorder 2, %s15
      // Predicated region
      $region41: #{tpu_custom_call.1} parent=5 // pred_check
        %p234 = pneg %p233
      $region42: #{tpu_custom_call.1} parent=5 // pred_check_branch
        %236 = sbr.rel (%p234) target = $region44
      $region43: #{tpu_custom_call.1} parent=5 // pred_region
        %s237 = ssub.s32 %s15, 2
        // Predicated region
        $region45: #{tpu_custom_call.1} parent=43 // pred_check
          %p238 = pneg %p112
        $region46: #{tpu_custom_call.1} parent=43 // pred_check_branch
          %240 = sbr.rel (%p238) target = $region48
        $region47: #{tpu_custom_call.1} parent=43 // pred_region
          %s241 = sand.u32 %s97, 1
          %s242 = scalar_lea.sflag [#allocation4], %s241
          %s243 = sand.u32 %s97, 1
          %s244 = smul.addr %s243, 8
          %s245 = scalar_lea.vmem [#allocation5], %s244
          %246 = dma.done %s242, 128
        $region48: #{tpu_custom_call.1} parent=43 // pred_fallthru
          _
      $region44: #{tpu_custom_call.1} parent=5 // pred_fallthru
        _
    $region6: #{tpu_custom_call.1} parent=1 // loop_footer
      %s19 = sadd.s32 1, %s15
    $region7: #{tpu_custom_call.1} parent=1 // loop_footer_branch
      %14 = sbr.rel target = $region3
    $region8: #{tpu_custom_call.1} parent=1 // loop_exit
      _
    %247 = vsyncpa [#allocation3], 1
    %s248 = scalar_lea.sflag [#allocation3], 1
    %249 = vsyncpa %s248, 1
    %250 = vsyncpa [#allocation4], 1
    %s251 = scalar_lea.sflag [#allocation4], 1
    %252 = vsyncpa %s251, 1

</llo_original>
